<compile_context>
chip_gen: v7x
topology: tpu7x:2x2x1
jax: 0.10.0
libtpu: 0.0.40
codegen_flags: <defaults>
</compile_context>

<pallas_src>
import functools
import math

import jax
import jax.numpy as jnp
from jax.experimental import pallas as pl
from jax.experimental.pallas import tpu as pltpu


# ----------------------------------------------------------------------------------
# Pass 1: fused Q/K/V projection.  Three separate matmuls with the same MXU-resident
# LHS (no post-matmul slicing, so arbitrary d_out stays lane-clean).
# ----------------------------------------------------------------------------------
def _qkv_proj_kernel(x_ref, wq_ref, wk_ref, wv_ref, q_ref, k_ref, v_ref):
    x = x_ref[...]  # (TS, D_IN) bf16
    q_ref[...] = jnp.dot(x, wq_ref[...], preferred_element_type=jnp.float32).astype(q_ref.dtype)
    k_ref[...] = jnp.dot(x, wk_ref[...], preferred_element_type=jnp.float32).astype(k_ref.dtype)
    v_ref[...] = jnp.dot(x, wv_ref[...], preferred_element_type=jnp.float32).astype(v_ref.dtype)


# ----------------------------------------------------------------------------------
# Pass 2: flash attention (unmasked, mirroring the PyTorch module where masked_fill's
# result is discarded).  Online-softmax state kept in f32 (required on v5e).
# ----------------------------------------------------------------------------------
def _flash_attn_kernel(q_ref, k_ref, v_ref, o_ref, m_sc, l_sc, acc_sc,
                       *, tk, t_actual, needs_mask):
    ki = pl.program_id(2)

    @pl.when(ki == 0)
    def _():
        m_sc[...] = jnp.full_like(m_sc, -jnp.inf)
        l_sc[...] = jnp.zeros_like(l_sc)
        acc_sc[...] = jnp.zeros_like(acc_sc)

    # scores for this (q-tile, kv-tile): q @ k^T, bf16 inputs, f32 accumulation.
    s = jax.lax.dot_general(
        q_ref[...], k_ref[...], (((1,), (1,)), ((), ())),
        preferred_element_type=jnp.float32,
    )  # (TQ, TK)

    if needs_mask:
        # Only the sequence-padding tail is masked out; NO causal mask (matches the
        # PyTorch forward, which discards masked_fill's result).
        col = ki * tk + jax.lax.broadcasted_iota(jnp.int32, s.shape, 1)
        s = jnp.where(col < t_actual, s, -jnp.inf)

    # --- online-softmax update (f32 throughout).
    m_new = jnp.maximum(m_sc[...], jnp.max(s, axis=-1, keepdims=True))
    alpha = jnp.exp(m_sc[...] - m_new)
    p = jnp.exp(s - m_new)
    l_sc[...] = alpha * l_sc[...] + jnp.sum(p, axis=-1, keepdims=True)
    acc_sc[...] = alpha * acc_sc[...] + jnp.dot(
        p.astype(v_ref.dtype), v_ref[...], preferred_element_type=jnp.float32
    )
    m_sc[...] = m_new

    # --- finalize: exact divide (once per q tile; negligible cost, better numerics).
    @pl.when(ki == pl.num_programs(2) - 1)
    def _():
        o_ref[...] = (acc_sc[...] / l_sc[...]).astype(o_ref.dtype)
        # TODO(synk): nn.Dropout is treated as eval-mode identity (deterministic forward).


def _seq_tile(t, preferred=256):
    """Full-sequence tile for short T; otherwise a lane-dense 128-multiple tile."""
    if t <= preferred:
        return t
    return preferred  # T is padded up to a tile multiple in the wrapper (never shrink).


def _vmem_limit(bytes_needed):
    """Explicit scoped-VMEM budget: 2x headroom, clamped to be safe on v5e/v6e/v7x."""
    return int(min(max(2 * bytes_needed, 32 << 20), 56 << 20))


def causal_attention(x, w_query, w_key, w_value, *, tq=None, tk=None):
    """x: (B, T, d_in); w_*: (d_out, d_in) as in nn.Linear.  Returns (B, T, d_out) f32."""
    B, T, D_IN = x.shape
    D_OUT = w_query.shape[0]
    scale = 1.0 / math.sqrt(D_OUT)  # == keys.shape[-1] ** 0.5 in the PyTorch module

    TQ = tq or _seq_tile(T)
    TK = tk or _seq_tile(T)

    # Pad T up to a common tile multiple; padded kv columns are masked in the kernel.
    step = math.lcm(TQ, TK)
    t_pad = ((T + step - 1) // step) * step
    needs_mask = t_pad != T

    x_bf16 = x.astype(jnp.bfloat16)
    if needs_mask:
        x_bf16 = jnp.pad(x_bf16, ((0, 0), (0, t_pad - T), (0, 0)))

    # Fold 1/sqrt(d_out) into W_query in f32 BEFORE the bf16 cast (single rounding).
    wq_t = (w_query.T * scale).astype(jnp.bfloat16)  # (d_in, d_out)
    wk_t = w_key.T.astype(jnp.bfloat16)
    wv_t = w_value.T.astype(jnp.bfloat16)

    # ---------------- Pass 1: Q/K/V projection (each x row projected exactly once). --
    TS = TQ
    proj_bytes = (2 * (TS * D_IN * 2 + 3 * TS * D_OUT * 2)     # double-buffered x + outs
                  + 3 * D_IN * D_OUT * 2)                      # resident weights
    q, k, v = pl.pallas_call(
        _qkv_proj_kernel,
        out_shape=tuple(jax.ShapeDtypeStruct((B, t_pad, D_OUT), jnp.bfloat16)
                        for _ in range(3)),
        grid_spec=pltpu.PrefetchScalarGridSpec(
            num_scalar_prefetch=0,
            grid=(B, t_pad // TS),
            in_specs=[
                pl.BlockSpec((None, TS, D_IN), lambda b, i: (b, i, 0)),
                pl.BlockSpec((D_IN, D_OUT), lambda b, i: (0, 0)),  # resident weights
                pl.BlockSpec((D_IN, D_OUT), lambda b, i: (0, 0)),
                pl.BlockSpec((D_IN, D_OUT), lambda b, i: (0, 0)),
            ],
            out_specs=[
                pl.BlockSpec((None, TS, D_OUT), lambda b, i: (b, i, 0)),
                pl.BlockSpec((None, TS, D_OUT), lambda b, i: (b, i, 0)),
                pl.BlockSpec((None, TS, D_OUT), lambda b, i: (b, i, 0)),
            ],
        ),
        compiler_params=pltpu.CompilerParams(
            dimension_semantics=("parallel", "parallel"),
            vmem_limit_bytes=_vmem_limit(proj_bytes),
        ),
    )(x_bf16, wq_t, wk_t, wv_t)

    # ---------------- Pass 2: flash attention over projected Q/K/V tiles. ------------
    attn_bytes = (2 * ((TQ + 2 * TK) * D_OUT * 2 + TQ * D_OUT * 4)   # dbl-buffered q/k/v/out
                  + TQ * (D_OUT + 2) * 4)                            # f32 scratch
    kernel = functools.partial(_flash_attn_kernel, tk=TK, t_actual=T, needs_mask=needs_mask)
    out = pl.pallas_call(
        kernel,
        out_shape=jax.ShapeDtypeStruct((B, t_pad, D_OUT), jnp.float32),
        grid_spec=pltpu.PrefetchScalarGridSpec(
            num_scalar_prefetch=0,
            grid=(B, t_pad // TQ, t_pad // TK),
            in_specs=[
                # Q tile: block index constant across ki -> stays VMEM-resident.
                pl.BlockSpec((None, TQ, D_OUT), lambda b, qi, ki: (b, qi, 0)),
                pl.BlockSpec((None, TK, D_OUT), lambda b, qi, ki: (b, ki, 0)),
                pl.BlockSpec((None, TK, D_OUT), lambda b, qi, ki: (b, ki, 0)),
            ],
            out_specs=pl.BlockSpec((None, TQ, D_OUT), lambda b, qi, ki: (b, qi, 0)),
            scratch_shapes=[
                pltpu.VMEM((TQ, 1), jnp.float32),      # running max  m
                pltpu.VMEM((TQ, 1), jnp.float32),      # running sum  l
                pltpu.VMEM((TQ, D_OUT), jnp.float32),  # f32 output accumulator
            ],
        ),
        compiler_params=pltpu.CompilerParams(
            # b and q-tile axes shard across TensorCores (v7x megacore); kv is reduction.
            dimension_semantics=("parallel", "parallel", "arbitrary"),
            vmem_limit_bytes=_vmem_limit(attn_bytes),
        ),
    )(q, k, v)

    return out[:, :T, :] if needs_mask else out


def causal_attention_ref(x, w_query, w_key, w_value):
    """Pure-JAX f32 reference mirroring the PyTorch forward (mask discarded, dropout=eval)."""
    q = jnp.einsum("btd,od->bto", x, w_query)
    k = jnp.einsum("btd,od->bto", x, w_key)
    v = jnp.einsum("btd,od->bto", x, w_value)
    scores = jnp.einsum("bqo,bko->bqk", q, k) / math.sqrt(k.shape[-1])
    w = jax.nn.softmax(scores, axis=-1)
    return jnp.einsum("bqk,bko->bqo", w, v)


if __name__ == "__main__":
    # --- Test 1: the exact data from the reference PyTorch script (B=2, T=6, d_in=3, d_out=2).
    inputs = jnp.array(
        [
            [0.43, 0.15, 0.89],
            [0.55, 0.87, 0.66],
            [0.57, 0.85, 0.64],
            [0.22, 0.58, 0.33],
            [0.77, 0.25, 0.10],
            [0.05, 0.80, 0.55],
        ],
        dtype=jnp.float32,
    )
    batch = jnp.stack((inputs, inputs), axis=0)  # (2, 6, 3)
    d_in, d_out = batch.shape[-1], 2

    key = jax.random.PRNGKey(0)
    kq, kk, kv = jax.random.split(key, 3)
    bound = 1.0 / math.sqrt(d_in)
    w_query = jax.random.uniform(kq, (d_out, d_in), jnp.float32, -bound, bound)
    w_key = jax.random.uniform(kk, (d_out, d_in), jnp.float32, -bound, bound)
    w_value = jax.random.uniform(kv, (d_out, d_in), jnp.float32, -bound, bound)

    out = jax.block_until_ready(causal_attention(batch, w_query, w_key, w_value))
    ref = causal_attention_ref(batch, w_query, w_key, w_value)
    assert out.shape == ref.shape
    assert jnp.allclose(out, ref, atol=2e-2, rtol=2e-2), "mismatch vs reference (demo shapes)"

    # --- Test 2: T not a tile multiple -> exercises padding + tail-mask + multi-tile
    #     flash attention (grid = (2, 2, 2) with TQ=TK=256, T padded 384 -> 512).
    B2, T2, DI2, DO2 = 2, 384, 32, 64
    k1, k2, k3, k4 = jax.random.split(jax.random.PRNGKey(0), 4)
    b2 = 1.0 / math.sqrt(DI2)
    x2 = jax.random.uniform(k1, (B2, T2, DI2), jnp.float32, -1.0, 1.0)
    wq2 = jax.random.uniform(k2, (DO2, DI2), jnp.float32, -b2, b2)
    wk2 = jax.random.uniform(k3, (DO2, DI2), jnp.float32, -b2, b2)
    wv2 = jax.random.uniform(k4, (DO2, DI2), jnp.float32, -b2, b2)

    out2 = jax.block_until_ready(causal_attention(x2, wq2, wk2, wv2))
    ref2 = causal_attention_ref(x2, wq2, wk2, wv2)
    assert out2.shape == ref2.shape
    assert jnp.allclose(out2, ref2, atol=2e-2, rtol=2e-2), "mismatch vs reference (tiled shapes)"

    print("KERNEL_OK")
</pallas_src>

<mosaic_0001>
module attributes {stable_mosaic.version = 11 : i64} {
  func.func @_qkv_proj_kernel(%arg0: i32, %arg1: i32, %arg2: memref<1x6x3xbf16, #tpu.memory_space<vmem>>, %arg3: memref<3x2xbf16, #tpu.memory_space<vmem>>, %arg4: memref<3x2xbf16, #tpu.memory_space<vmem>>, %arg5: memref<3x2xbf16, #tpu.memory_space<vmem>>, %arg6: memref<1x6x2xbf16, #tpu.memory_space<vmem>>, %arg7: memref<1x6x2xbf16, #tpu.memory_space<vmem>>, %arg8: memref<1x6x2xbf16, #tpu.memory_space<vmem>>) attributes {dimension_semantics = [#tpu.dimension_semantics<parallel>, #tpu.dimension_semantics<parallel>], iteration_bounds = array<i64: 2, 1>, scalar_prefetch = 0 : i64, scratch_operands = 0 : i64, tpu.core_type = #tpu.core_type<tc>, window_params = [{transform_indices = @transform_0, window_bounds = array<i64: 1, 6, 3>}, {pipeline_mode = #tpu.pipeline_mode<synchronous>, transform_indices = @transform_1, window_bounds = array<i64: 3, 2>}, {pipeline_mode = #tpu.pipeline_mode<synchronous>, transform_indices = @transform_2, window_bounds = array<i64: 3, 2>}, {pipeline_mode = #tpu.pipeline_mode<synchronous>, transform_indices = @transform_3, window_bounds = array<i64: 3, 2>}, {transform_indices = @transform_4, window_bounds = array<i64: 1, 6, 2>}, {transform_indices = @transform_5, window_bounds = array<i64: 1, 6, 2>}, {transform_indices = @transform_6, window_bounds = array<i64: 1, 6, 2>}]} {
    %c0 = arith.constant 0 : index
    %c0_0 = arith.constant 0 : index
    %c0_1 = arith.constant 0 : index
    %0 = vector.load %arg2[%c0, %c0_0, %c0_1] : memref<1x6x3xbf16, #tpu.memory_space<vmem>>, vector<1x6x3xbf16>
    %1 = vector.shape_cast %0 : vector<1x6x3xbf16> to vector<6x3xbf16>
    %c0_2 = arith.constant 0 : index
    %c0_3 = arith.constant 0 : index
    %2 = vector.load %arg3[%c0_2, %c0_3] : memref<3x2xbf16, #tpu.memory_space<vmem>>, vector<3x2xbf16>
    %cst = arith.constant dense<0.000000e+00> : vector<6x2xf32>
    %3 = tpu.matmul %1, %2, %cst {dimension_numbers = #tpu.dot_dimension_numbers<[1], [0], [0], [1], [0, 0, 1, 1], [], []>} : vector<6x3xbf16>, vector<3x2xbf16>, vector<6x2xf32> -> vector<6x2xf32>
    %4 = arith.truncf %3 : vector<6x2xf32> to vector<6x2xbf16>
    %c0_4 = arith.constant 0 : index
    %c0_5 = arith.constant 0 : index
    %c0_6 = arith.constant 0 : index
    %5 = vector.load %arg6[%c0_4, %c0_5, %c0_6] : memref<1x6x2xbf16, #tpu.memory_space<vmem>>, vector<1x6x2xbf16>
    %6 = vector.shape_cast %5 : vector<1x6x2xbf16> to vector<6x2xbf16>
    %7 = vector.shape_cast %4 : vector<6x2xbf16> to vector<1x6x2xbf16>
    tpu.vector_store %arg6[%c0_4, %c0_5, %c0_6], %7 {strides = array<i32>} : memref<1x6x2xbf16, #tpu.memory_space<vmem>>, vector<1x6x2xbf16>,
    %c0_7 = arith.constant 0 : index
    %c0_8 = arith.constant 0 : index
    %8 = vector.load %arg4[%c0_7, %c0_8] : memref<3x2xbf16, #tpu.memory_space<vmem>>, vector<3x2xbf16>
    %cst_9 = arith.constant dense<0.000000e+00> : vector<6x2xf32>
    %9 = tpu.matmul %1, %8, %cst_9 {dimension_numbers = #tpu.dot_dimension_numbers<[1], [0], [0], [1], [0, 0, 1, 1], [], []>} : vector<6x3xbf16>, vector<3x2xbf16>, vector<6x2xf32> -> vector<6x2xf32>
    %10 = arith.truncf %9 : vector<6x2xf32> to vector<6x2xbf16>
    %c0_10 = arith.constant 0 : index
    %c0_11 = arith.constant 0 : index
    %c0_12 = arith.constant 0 : index
    %11 = vector.load %arg7[%c0_10, %c0_11, %c0_12] : memref<1x6x2xbf16, #tpu.memory_space<vmem>>, vector<1x6x2xbf16>
    %12 = vector.shape_cast %11 : vector<1x6x2xbf16> to vector<6x2xbf16>
    %13 = vector.shape_cast %10 : vector<6x2xbf16> to vector<1x6x2xbf16>
    tpu.vector_store %arg7[%c0_10, %c0_11, %c0_12], %13 {strides = array<i32>} : memref<1x6x2xbf16, #tpu.memory_space<vmem>>, vector<1x6x2xbf16>,
    %c0_13 = arith.constant 0 : index
    %c0_14 = arith.constant 0 : index
    %14 = vector.load %arg5[%c0_13, %c0_14] : memref<3x2xbf16, #tpu.memory_space<vmem>>, vector<3x2xbf16>
    %cst_15 = arith.constant dense<0.000000e+00> : vector<6x2xf32>
    %15 = tpu.matmul %1, %14, %cst_15 {dimension_numbers = #tpu.dot_dimension_numbers<[1], [0], [0], [1], [0, 0, 1, 1], [], []>} : vector<6x3xbf16>, vector<3x2xbf16>, vector<6x2xf32> -> vector<6x2xf32>
    %16 = arith.truncf %15 : vector<6x2xf32> to vector<6x2xbf16>
    %c0_16 = arith.constant 0 : index
    %c0_17 = arith.constant 0 : index
    %c0_18 = arith.constant 0 : index
    %17 = vector.load %arg8[%c0_16, %c0_17, %c0_18] : memref<1x6x2xbf16, #tpu.memory_space<vmem>>, vector<1x6x2xbf16>
    %18 = vector.shape_cast %17 : vector<1x6x2xbf16> to vector<6x2xbf16>
    %19 = vector.shape_cast %16 : vector<6x2xbf16> to vector<1x6x2xbf16>
    tpu.vector_store %arg8[%c0_16, %c0_17, %c0_18], %19 {strides = array<i32>} : memref<1x6x2xbf16, #tpu.memory_space<vmem>>, vector<1x6x2xbf16>,
    return
  }
  func.func @transform_0(%arg0: i32, %arg1: i32) -> (i32, i32, i32) {
    %c0_i32 = arith.constant 0 : i32
    %c0_i32_0 = arith.constant 0 : i32
    return %arg0, %arg1, %c0_i32 : i32, i32, i32
  }
  func.func @transform_1(%arg0: i32, %arg1: i32) -> (i32, i32) {
    %c0_i32 = arith.constant 0 : i32
    %c0_i32_0 = arith.constant 0 : i32
    %c0_i32_1 = arith.constant 0 : i32
    return %c0_i32, %c0_i32_0 : i32, i32
  }
  func.func @transform_2(%arg0: i32, %arg1: i32) -> (i32, i32) {
    %c0_i32 = arith.constant 0 : i32
    %c0_i32_0 = arith.constant 0 : i32
    %c0_i32_1 = arith.constant 0 : i32
    return %c0_i32, %c0_i32_0 : i32, i32
  }
  func.func @transform_3(%arg0: i32, %arg1: i32) -> (i32, i32) {
    %c0_i32 = arith.constant 0 : i32
    %c0_i32_0 = arith.constant 0 : i32
    %c0_i32_1 = arith.constant 0 : i32
    return %c0_i32, %c0_i32_0 : i32, i32
  }
  func.func @transform_4(%arg0: i32, %arg1: i32) -> (i32, i32, i32) {
    %c0_i32 = arith.constant 0 : i32
    %c0_i32_0 = arith.constant 0 : i32
    return %arg0, %arg1, %c0_i32 : i32, i32, i32
  }
  func.func @transform_5(%arg0: i32, %arg1: i32) -> (i32, i32, i32) {
    %c0_i32 = arith.constant 0 : i32
    %c0_i32_0 = arith.constant 0 : i32
    return %arg0, %arg1, %c0_i32 : i32, i32, i32
  }
  func.func @transform_6(%arg0: i32, %arg1: i32) -> (i32, i32, i32) {
    %c0_i32 = arith.constant 0 : i32
    %c0_i32_0 = arith.constant 0 : i32
    return %arg0, %arg1, %c0_i32 : i32, i32, i32
  }
}

</mosaic_0001>

<llo_original>
// kernel: tpu_custom_call.1
$region0: #{tpu_custom_call.1}
  #allocation0 [shape = 'u32[]', space=smem, size = 0x4, offset = 0x4, fixed_abs, tag = 'smem constant byte address 0x4 - core index']
  #allocation1 [shape = 'u32[144,128]{1,0:T(1,128)}', space=vmem, size = 0x12000, scoped, tag = 'internal scratch']
  %s0 = inlined_call_operand.vmem [shape: bf16[2,6,3], index: 0, kind: input, shape index: {}]
  %s1 = inlined_call_operand.vmem [shape: bf16[3,2], index: 1, kind: input, shape index: {}]
  %s2 = inlined_call_operand.vmem [shape: bf16[3,2], index: 2, kind: input, shape index: {}]
  %s3 = inlined_call_operand.vmem [shape: bf16[3,2], index: 3, kind: input, shape index: {}]
  %s4 = inlined_call_operand.vmem [shape: bf16[2,6,2], index: 4, kind: output, shape index: {0}]
  %s5 = inlined_call_operand.vmem [shape: bf16[2,6,2], index: 5, kind: output, shape index: {1}]
  %s6 = inlined_call_operand.vmem [shape: bf16[2,6,2], index: 6, kind: output, shape index: {2}]
  %7 = xla_tuple %s4, %s5, %s6
  %s8 = sld [smem:[#allocation0]]
  $region65: #{tpu_custom_call.1} parent=0
    _
  %s10 = ssub.s32 1, %s8
  %s11 = scalar_select 0, %s10, %s8
  loop: start=0, step=1, limit=4
  $region2: #{tpu_custom_call.1} parent=0 // loop_pre_header
    _
  $region3: #{tpu_custom_call.1} parent=0 // loop_header
    %s13 = sphi 0, %s17
    %p14 = scmp.ge.s32.totalorder %s13, 4
    %s20 = sphi 0, %s32
    %s21 = sphi 0, %s28
    %s22 = sphi 0, %s20
    %s23 = sphi 0, %s21
    %s24 = sphi 0, %s22
    %s25 = sphi 0, %s23
    %s37 = sphi 0, %s39
    %s40 = sphi 0, %s37
    %s41 = sphi 0, %s40
    %s57 = sphi 0, %s41
    %s61 = sphi 0, %s61
    %s63 = sphi 0, %s61
    %s64 = sphi 0, %s63
    %s78 = sphi 0, %s64
    %s82 = sphi 0, %s82
    %s84 = sphi 0, %s82
    %s85 = sphi 0, %s84
    %s99 = sphi 0, %s85
    %s103 = sphi 0, %s103
    %s105 = sphi 0, %s103
    %s106 = sphi 0, %s105
    %s120 = sphi 0, %s106
    %s128 = sphi 0, %s130
    %s131 = sphi 0, %s128
    %s132 = sphi 0, %s131
    %s148 = sphi 0, %s132
    %s156 = sphi 0, %s158
    %s159 = sphi 0, %s156
    %s160 = sphi 0, %s159
    %s176 = sphi 0, %s160
    %s184 = sphi 0, %s186
    %s187 = sphi 0, %s184
    %s188 = sphi 0, %s187
    %s204 = sphi 0, %s188
  $region4: #{tpu_custom_call.1} parent=0 // loop_header_branch
    %16 = sbr.rel (%p14) target = $region8
  $region5: #{tpu_custom_call.1} parent=0 // loop_body
    %s18 = ssub.s32 %s13, 1
    %s19 = ssub.s32 %s13, 2
    %s26 = sadd.s32 1, %s21
    %p27 = scmp.ge.s32.totalorder %s26, 1
    %s28 = scalar_select %p27, 0, %s26
    %s29 = sadd.s32 1, %s20
    %s30 = scalar_select %p27, %s29, %s20
    %p31 = scmp.ge.s32.totalorder %s30, 2
    %s32 = scalar_select %p31, 0, %s30
    %s33 = ssub.s32 %s20, %s32
    %s34 = ssub.s32 %s21, %s28
    %s35 = sor.u32 %s33, %s34
    %p36 = scmp.eq.s32.totalorder %s35, 0
    %s38 = sadd.s32 %s37, 1
    %s39 = scalar_select %p36, %s37, %s38
    %p42 = pneg %p36
    %p43 = scmp.eq.s32.totalorder %s13, 1
    %p44 = por %p42, %p43
    %p45 = scmp.ne.s32.totalorder %s37, %s40
    %p46 = scmp.eq.s32.totalorder %s13, 0
    %p47 = por %p45, %p46
    %p48 = scmp.ne.s32.totalorder %s37, %s40
    %p49 = scmp.eq.s32.totalorder %s18, 1
    %p50 = por %p48, %p49
    %p51 = scmp.ne.s32.totalorder %s40, %s41
    %p52 = scmp.eq.s32.totalorder %s18, 0
    %p53 = por %p51, %p52
    %p54 = scmp.ne.s32.totalorder %s40, %s41
    %p55 = scmp.eq.s32.totalorder %s19, 1
    %p56 = por %p54, %p55
    %p58 = scmp.ne.s32.totalorder %s41, %s57
    %p59 = scmp.eq.s32.totalorder %s19, 0
    %p60 = por %p58, %p59
    %s62 = sadd.s32 %s61, 1
    %p65 = scmp.eq.s32.totalorder %s13, 1
    %p66 = scmp.ne.s32.totalorder %s61, %s63
    %p67 = scmp.eq.s32.totalorder %s13, 0
    %p68 = por %p66, %p67
    %p69 = scmp.ne.s32.totalorder %s61, %s63
    %p70 = scmp.eq.s32.totalorder %s18, 1
    %p71 = por %p69, %p70
    %p72 = scmp.ne.s32.totalorder %s63, %s64
    %p73 = scmp.eq.s32.totalorder %s18, 0
    %p74 = por %p72, %p73
    %p75 = scmp.ne.s32.totalorder %s63, %s64
    %p76 = scmp.eq.s32.totalorder %s19, 1
    %p77 = por %p75, %p76
    %p79 = scmp.ne.s32.totalorder %s64, %s78
    %p80 = scmp.eq.s32.totalorder %s19, 0
    %p81 = por %p79, %p80
    %s83 = sadd.s32 %s82, 1
    %p86 = scmp.eq.s32.totalorder %s13, 1
    %p87 = scmp.ne.s32.totalorder %s82, %s84
    %p88 = scmp.eq.s32.totalorder %s13, 0
    %p89 = por %p87, %p88
    %p90 = scmp.ne.s32.totalorder %s82, %s84
    %p91 = scmp.eq.s32.totalorder %s18, 1
    %p92 = por %p90, %p91
    %p93 = scmp.ne.s32.totalorder %s84, %s85
    %p94 = scmp.eq.s32.totalorder %s18, 0
    %p95 = por %p93, %p94
    %p96 = scmp.ne.s32.totalorder %s84, %s85
    %p97 = scmp.eq.s32.totalorder %s19, 1
    %p98 = por %p96, %p97
    %p100 = scmp.ne.s32.totalorder %s85, %s99
    %p101 = scmp.eq.s32.totalorder %s19, 0
    %p102 = por %p100, %p101
    %s104 = sadd.s32 %s103, 1
    %p107 = scmp.eq.s32.totalorder %s13, 1
    %p108 = scmp.ne.s32.totalorder %s103, %s105
    %p109 = scmp.eq.s32.totalorder %s13, 0
    %p110 = por %p108, %p109
    %p111 = scmp.ne.s32.totalorder %s103, %s105
    %p112 = scmp.eq.s32.totalorder %s18, 1
    %p113 = por %p111, %p112
    %p114 = scmp.ne.s32.totalorder %s105, %s106
    %p115 = scmp.eq.s32.totalorder %s18, 0
    %p116 = por %p114, %p115
    %p117 = scmp.ne.s32.totalorder %s105, %s106
    %p118 = scmp.eq.s32.totalorder %s19, 1
    %p119 = por %p117, %p118
    %p121 = scmp.ne.s32.totalorder %s106, %s120
    %p122 = scmp.eq.s32.totalorder %s19, 0
    %p123 = por %p121, %p122
    %s124 = ssub.s32 %s20, %s32
    %s125 = ssub.s32 %s21, %s28
    %s126 = sor.u32 %s124, %s125
    %p127 = scmp.eq.s32.totalorder %s126, 0
    %s129 = sadd.s32 %s128, 1
    %s130 = scalar_select %p127, %s128, %s129
    %p133 = pneg %p127
    %p134 = scmp.eq.s32.totalorder %s13, 1
    %p135 = por %p133, %p134
    %p136 = scmp.ne.s32.totalorder %s128, %s131
    %p137 = scmp.eq.s32.totalorder %s13, 0
    %p138 = por %p136, %p137
    %p139 = scmp.ne.s32.totalorder %s128, %s131
    %p140 = scmp.eq.s32.totalorder %s18, 1
    %p141 = por %p139, %p140
    %p142 = scmp.ne.s32.totalorder %s131, %s132
    %p143 = scmp.eq.s32.totalorder %s18, 0
    %p144 = por %p142, %p143
    %p145 = scmp.ne.s32.totalorder %s131, %s132
    %p146 = scmp.eq.s32.totalorder %s19, 1
    %p147 = por %p145, %p146
    %p149 = scmp.ne.s32.totalorder %s132, %s148
    %p150 = scmp.eq.s32.totalorder %s19, 0
    %p151 = por %p149, %p150
    %s152 = ssub.s32 %s20, %s32
    %s153 = ssub.s32 %s21, %s28
    %s154 = sor.u32 %s152, %s153
    %p155 = scmp.eq.s32.totalorder %s154, 0
    %s157 = sadd.s32 %s156, 1
    %s158 = scalar_select %p155, %s156, %s157
    %p161 = pneg %p155
    %p162 = scmp.eq.s32.totalorder %s13, 1
    %p163 = por %p161, %p162
    %p164 = scmp.ne.s32.totalorder %s156, %s159
    %p165 = scmp.eq.s32.totalorder %s13, 0
    %p166 = por %p164, %p165
    %p167 = scmp.ne.s32.totalorder %s156, %s159
    %p168 = scmp.eq.s32.totalorder %s18, 1
    %p169 = por %p167, %p168
    %p170 = scmp.ne.s32.totalorder %s159, %s160
    %p171 = scmp.eq.s32.totalorder %s18, 0
    %p172 = por %p170, %p171
    %p173 = scmp.ne.s32.totalorder %s159, %s160
    %p174 = scmp.eq.s32.totalorder %s19, 1
    %p175 = por %p173, %p174
    %p177 = scmp.ne.s32.totalorder %s160, %s176
    %p178 = scmp.eq.s32.totalorder %s19, 0
    %p179 = por %p177, %p178
    %s180 = ssub.s32 %s20, %s32
    %s181 = ssub.s32 %s21, %s28
    %s182 = sor.u32 %s180, %s181
    %p183 = scmp.eq.s32.totalorder %s182, 0
    %s185 = sadd.s32 %s184, 1
    %s186 = scalar_select %p183, %s184, %s185
    %p189 = pneg %p183
    %p190 = scmp.eq.s32.totalorder %s13, 1
    %p191 = por %p189, %p190
    %p192 = scmp.ne.s32.totalorder %s184, %s187
    %p193 = scmp.eq.s32.totalorder %s13, 0
    %p194 = por %p192, %p193
    %p195 = scmp.ne.s32.totalorder %s184, %s187
    %p196 = scmp.eq.s32.totalorder %s18, 1
    %p197 = por %p195, %p196
    %p198 = scmp.ne.s32.totalorder %s187, %s188
    %p199 = scmp.eq.s32.totalorder %s18, 0
    %p200 = por %p198, %p199
    %p201 = scmp.ne.s32.totalorder %s187, %s188
    %p202 = scmp.eq.s32.totalorder %s19, 1
    %p203 = por %p201, %p202
    %p205 = scmp.ne.s32.totalorder %s188, %s204
    %p206 = scmp.eq.s32.totalorder %s19, 0
    %p207 = por %p205, %p206
    %p208 = scmp.le.s32.totalorder 1, %s13
    %p209 = scmp.lt.s32.totalorder %s13, 3
    %p210 = pnand %p208, %p209
    %p211 = pneg %p210
    // Predicated region
    $region9: #{tpu_custom_call.1} parent=5 // pred_check
      _
    $region10: #{tpu_custom_call.1} parent=5 // pred_check_branch
      %213 = sbr.rel (%p210) target = $region12
    $region11: #{tpu_custom_call.1} parent=5 // pred_region
      %s214 = ssub.s32 %s13, 1
      // Predicated region
      $region13: #{tpu_custom_call.1} parent=11 // pred_check
        %p215 = pneg %p74
      $region14: #{tpu_custom_call.1} parent=11 // pred_check_branch
        %217 = sbr.rel (%p215) target = $region16
      $region15: #{tpu_custom_call.1} parent=11 // pred_region
        _
      $region16: #{tpu_custom_call.1} parent=11 // pred_fallthru
        _
      // Predicated region
      $region17: #{tpu_custom_call.1} parent=11 // pred_check
        %p218 = pneg %p95
      $region18: #{tpu_custom_call.1} parent=11 // pred_check_branch
        %220 = sbr.rel (%p218) target = $region20
      $region19: #{tpu_custom_call.1} parent=11 // pred_region
        _
      $region20: #{tpu_custom_call.1} parent=11 // pred_fallthru
        _
      // Predicated region
      $region21: #{tpu_custom_call.1} parent=11 // pred_check
        %p221 = pneg %p116
      $region22: #{tpu_custom_call.1} parent=11 // pred_check_branch
        %223 = sbr.rel (%p221) target = $region24
      $region23: #{tpu_custom_call.1} parent=11 // pred_region
        _
      $region24: #{tpu_custom_call.1} parent=11 // pred_fallthru
        _
    $region12: #{tpu_custom_call.1} parent=5 // pred_fallthru
      _
    %p224 = scmp.lt.s32.totalorder %s13, 2
    // Predicated region
    $region25: #{tpu_custom_call.1} parent=5 // pred_check
      %p225 = pneg %p224
    $region26: #{tpu_custom_call.1} parent=5 // pred_check_branch
      %227 = sbr.rel (%p225) target = $region28
    $region27: #{tpu_custom_call.1} parent=5 // pred_region
      // Predicated region
      $region29: #{tpu_custom_call.1} parent=27 // pred_check
        %p228 = pneg %p47
      $region30: #{tpu_custom_call.1} parent=27 // pred_check_branch
        %230 = sbr.rel (%p228) target = $region32
      $region31: #{tpu_custom_call.1} parent=27 // pred_region
        %p231 = scmp.lt.s32.totalorder %s20, 1
        %s232 = scalar_select %p231, %s20, 1
        %p233 = scmp.lt.s32.totalorder %s21, 0
        %s234 = scalar_select %p233, %s21, 0
        %s235 = sadd.s32 %s234, %s232
        %s236 = smul.addr %s235, 4
        %s237 = scalar_lea.vmem %s0, %s236
      $region32: #{tpu_custom_call.1} parent=27 // pred_fallthru
        _
    $region28: #{tpu_custom_call.1} parent=5 // pred_fallthru
      _
    %p238 = scmp.le.s32.totalorder 1, %s13
    %p239 = scmp.lt.s32.totalorder %s13, 3
    %p240 = pnand %p238, %p239
    %p241 = pneg %p240
    // Predicated region
    $region33: #{tpu_custom_call.1} parent=5 // pred_check
      _
    $region34: #{tpu_custom_call.1} parent=5 // pred_check_branch
      %243 = sbr.rel (%p240) target = $region36
    $region35: #{tpu_custom_call.1} parent=5 // pred_region
      %s244 = ssub.s32 %s13, 1
      %p245 = scmp.lt.s32.totalorder %s22, 1
      %s246 = scalar_select %p245, %s22, 1
      %p247 = scmp.lt.s32.totalorder %s23, 0
      %s248 = scalar_select %p247, %s23, 0
      %s249 = sadd.s32 %s248, %s246
      %s250 = smul.addr %s249, 4
      %s251 = scalar_lea.vmem %s0, %s250
      %p252 = pneg %p53
      %p253 = pneg %p50
      %p254 = pneg %p74
      %p255 = pneg %p71
      %p256 = pneg %p95
      %p257 = pneg %p92
      %p258 = pneg %p116
      %p259 = pneg %p113
      %p260 = pneg %p144
      %p261 = pneg %p141
      %p262 = scmp.lt.s32.totalorder %s22, 1
      %s263 = scalar_select %p262, %s22, 1
      %p264 = scmp.lt.s32.totalorder %s23, 0
      %s265 = scalar_select %p264, %s23, 0
      %s266 = sadd.s32 %s265, %s263
      %s267 = smul.addr %s266, 4
      %s268 = scalar_lea.vmem %s4, %s267
      %p269 = pneg %p172
      %p270 = pneg %p169
      %p271 = scmp.lt.s32.totalorder %s22, 1
      %s272 = scalar_select %p271, %s22, 1
      %p273 = scmp.lt.s32.totalorder %s23, 0
      %s274 = scalar_select %p273, %s23, 0
      %s275 = sadd.s32 %s274, %s272
      %s276 = smul.addr %s275, 4
      %s277 = scalar_lea.vmem %s5, %s276
      %p278 = pneg %p200
      %p279 = pneg %p197
      %p280 = scmp.lt.s32.totalorder %s22, 1
      %s281 = scalar_select %p280, %s22, 1
      %p282 = scmp.lt.s32.totalorder %s23, 0
      %s283 = scalar_select %p282, %s23, 0
      %s284 = sadd.s32 %s283, %s281
      %s285 = smul.addr %s284, 4
      %s286 = scalar_lea.vmem %s6, %s285
      %p287 = scmp.lt.s32.totalorder %s22, 1
      %s288 = scalar_select %p287, %s22, 1
      %p289 = scmp.lt.s32.totalorder %s23, 0
      %s290 = scalar_select %p289, %s23, 0
      %s291 = sadd.s32 %s290, %s288
      %s292 = smul.addr %s291, 4
      %s293 = scalar_lea.vmem %s0, %s292
      %p294 = scmp.lt.s32.totalorder %s22, 1
      %s295 = scalar_select %p294, %s22, 1
      %p296 = scmp.lt.s32.totalorder %s23, 0
      %s297 = scalar_select %p296, %s23, 0
      %s298 = sadd.s32 %s297, %s295
      %s299 = smul.addr %s298, 4
      %s300 = scalar_lea.vmem %s4, %s299
      %p301 = scmp.lt.s32.totalorder %s22, 1
      %s302 = scalar_select %p301, %s22, 1
      %p303 = scmp.lt.s32.totalorder %s23, 0
      %s304 = scalar_select %p303, %s23, 0
      %s305 = sadd.s32 %s304, %s302
      %s306 = smul.addr %s305, 4
      %s307 = scalar_lea.vmem %s5, %s306
      %p308 = scmp.lt.s32.totalorder %s22, 1
      %s309 = scalar_select %p308, %s22, 1
      %p310 = scmp.lt.s32.totalorder %s23, 0
      %s311 = scalar_select %p310, %s23, 0
      %s312 = sadd.s32 %s311, %s309
      %s313 = smul.addr %s312, 4
      %s314 = scalar_lea.vmem %s6, %s313
      %v316 = vld [vmem:[%s293] sm:$0x7]
      %v317 = vld [vmem:[%s1] sm:$0x3]
      %vm318 = vcmask 23552
      %v320 = vsel %vm318, %v316, 0
      %vm322 = vcmask 1040384
      %vm323 = vcmask 1041408
      %v324 = vsel %vm322, 4294967295, 65535
      %v325 = vsel %vm323, %v324, 0
      %v327 = vand.u32 %v317, %v325
      %329 = vmatprep.subr.bf16.mxu0 0
      %330 = vmatpush1.bf16.msra.mxu0 %v327
      %331 = vmatprep.subr.bf16.mxu0 0
      %332 = vmatpush1.bf16.msra.mxu0 0
      %333 = vmatprep.subr.bf16.mxu0 0
      %334 = vmatpush1.bf16.msra.mxu0 0
      %335 = vmatprep.subr.bf16.mxu0 0
      %336 = vmatpush1.bf16.msra.mxu0 0
      %337 = vmatprep.subr.bf16.mxu0 0
      %338 = vmatpush1.bf16.msra.mxu0 0
      %339 = vmatprep.subr.bf16.mxu0 0
      %340 = vmatpush1.bf16.msra.mxu0 0
      %341 = vmatprep.subr.bf16.mxu0 0
      %342 = vmatpush1.bf16.msra.mxu0 0
      %343 = vmatprep.subr.bf16.mxu0 0
      %344 = vmatpush1.bf16.msra.mxu0 0
      %345 = vmatprep.subr.bf16.mxu0 0
      %346 = vmatpush1.bf16.msra.mxu0 0
      %347 = vmatprep.subr.bf16.mxu0 0
      %348 = vmatpush1.bf16.msra.mxu0 0
      %349 = vmatprep.subr.bf16.mxu0 0
      %350 = vmatpush1.bf16.msra.mxu0 0
      %351 = vmatprep.subr.bf16.mxu0 0
      %352 = vmatpush1.bf16.msra.mxu0 0
      %353 = vmatprep.subr.bf16.mxu0 0
      %354 = vmatpush1.bf16.msra.mxu0 0
      %355 = vmatprep.subr.bf16.mxu0 0
      %356 = vmatpush1.bf16.msra.mxu0 0
      %357 = vmatprep.subr.bf16.mxu0 0
      %358 = vmatpush1.bf16.msra.mxu0 0
      %359 = vmatprep.subr.bf16.mxu0 0
      %360 = vmatpush1.bf16.msra.mxu0 0
      %361 = vmatprep.mubr.bf16.mxu0 0
      %362 = vmatmul.mubr.bf16.gmra.mrb[0].mxu0 %v320
      %v363 = vpop.f32.mrb[0].mxu0
      %v364 = vadd.f32 0.0, %v363
      %v365 = vpop.f32.mrb[0].mxu0
      %v366 = vpop.f32.mrb[0].mxu0
      %v367 = vpop.f32.mrb[0].mxu0
      %368 = vdwg.mxu0
      %v369 = vpack.c.bf16 %v364, %v364
      %vm370 = vcmask 10240
      %371 = vst.msk [vmem:[%s300] sm:$0x7] %vm370, %v369
      %v372 = vld [vmem:[%s2] sm:$0x3]
      %v374 = vand.u32 %v372, %v325
      %376 = vmatprep.subr.bf16.mxu0 0
      %377 = vmatpush1.bf16.msra.mxu0 %v374
      %378 = vmatprep.subr.bf16.mxu0 0
      %379 = vmatpush1.bf16.msra.mxu0 0
      %380 = vmatprep.subr.bf16.mxu0 0
      %381 = vmatpush1.bf16.msra.mxu0 0
      %382 = vmatprep.subr.bf16.mxu0 0
      %383 = vmatpush1.bf16.msra.mxu0 0
      %384 = vmatprep.subr.bf16.mxu0 0
      %385 = vmatpush1.bf16.msra.mxu0 0
      %386 = vmatprep.subr.bf16.mxu0 0
      %387 = vmatpush1.bf16.msra.mxu0 0
      %388 = vmatprep.subr.bf16.mxu0 0
      %389 = vmatpush1.bf16.msra.mxu0 0
      %390 = vmatprep.subr.bf16.mxu0 0
      %391 = vmatpush1.bf16.msra.mxu0 0
      %392 = vmatprep.subr.bf16.mxu0 0
      %393 = vmatpush1.bf16.msra.mxu0 0
      %394 = vmatprep.subr.bf16.mxu0 0
      %395 = vmatpush1.bf16.msra.mxu0 0
      %396 = vmatprep.subr.bf16.mxu0 0
      %397 = vmatpush1.bf16.msra.mxu0 0
      %398 = vmatprep.subr.bf16.mxu0 0
      %399 = vmatpush1.bf16.msra.mxu0 0
      %400 = vmatprep.subr.bf16.mxu0 0
      %401 = vmatpush1.bf16.msra.mxu0 0
      %402 = vmatprep.subr.bf16.mxu0 0
      %403 = vmatpush1.bf16.msra.mxu0 0
      %404 = vmatprep.subr.bf16.mxu0 0
      %405 = vmatpush1.bf16.msra.mxu0 0
      %406 = vmatprep.subr.bf16.mxu0 0
      %407 = vmatpush1.bf16.msra.mxu0 0
      %408 = vmatprep.mubr.bf16.mxu0 0
      %409 = vmatmul.mubr.bf16.gmra.mrb[0].mxu0 %v320
      %v410 = vpop.f32.mrb[0].mxu0
      %v411 = vadd.f32 0.0, %v410
      %v412 = vpop.f32.mrb[0].mxu0
      %v413 = vpop.f32.mrb[0].mxu0
      %v414 = vpop.f32.mrb[0].mxu0
      %415 = vdwg.mxu0
      %v416 = vpack.c.bf16 %v411, %v411
      %417 = vst.msk [vmem:[%s307] sm:$0x7] %vm370, %v416
      %v418 = vld [vmem:[%s3] sm:$0x3]
      %v420 = vand.u32 %v418, %v325
      %422 = vmatprep.subr.bf16.mxu0 0
      %423 = vmatpush1.bf16.msra.mxu0 %v420
      %424 = vmatprep.subr.bf16.mxu0 0
      %425 = vmatpush1.bf16.msra.mxu0 0
      %426 = vmatprep.subr.bf16.mxu0 0
      %427 = vmatpush1.bf16.msra.mxu0 0
      %428 = vmatprep.subr.bf16.mxu0 0
      %429 = vmatpush1.bf16.msra.mxu0 0
      %430 = vmatprep.subr.bf16.mxu0 0
      %431 = vmatpush1.bf16.msra.mxu0 0
      %432 = vmatprep.subr.bf16.mxu0 0
      %433 = vmatpush1.bf16.msra.mxu0 0
      %434 = vmatprep.subr.bf16.mxu0 0
      %435 = vmatpush1.bf16.msra.mxu0 0
      %436 = vmatprep.subr.bf16.mxu0 0
      %437 = vmatpush1.bf16.msra.mxu0 0
      %438 = vmatprep.subr.bf16.mxu0 0
      %439 = vmatpush1.bf16.msra.mxu0 0
      %440 = vmatprep.subr.bf16.mxu0 0
      %441 = vmatpush1.bf16.msra.mxu0 0
      %442 = vmatprep.subr.bf16.mxu0 0
      %443 = vmatpush1.bf16.msra.mxu0 0
      %444 = vmatprep.subr.bf16.mxu0 0
      %445 = vmatpush1.bf16.msra.mxu0 0
      %446 = vmatprep.subr.bf16.mxu0 0
      %447 = vmatpush1.bf16.msra.mxu0 0
      %448 = vmatprep.subr.bf16.mxu0 0
      %449 = vmatpush1.bf16.msra.mxu0 0
      %450 = vmatprep.subr.bf16.mxu0 0
      %451 = vmatpush1.bf16.msra.mxu0 0
      %452 = vmatprep.subr.bf16.mxu0 0
      %453 = vmatpush1.bf16.msra.mxu0 0
      %454 = vmatprep.mubr.bf16.mxu0 0
      %455 = vmatmul.mubr.bf16.gmra.mrb[0].mxu0 %v320
      %v456 = vpop.f32.mrb[0].mxu0
      %v457 = vadd.f32 0.0, %v456
      %v458 = vpop.f32.mrb[0].mxu0
      %v459 = vpop.f32.mrb[0].mxu0
      %v460 = vpop.f32.mrb[0].mxu0
      %461 = vdwg.mxu0
      %v462 = vpack.c.bf16 %v457, %v457
      %463 = vst.msk [vmem:[%s314] sm:$0x7] %vm370, %v462
      %p464 = scmp.lt.s32.totalorder %s22, 1
      %s465 = scalar_select %p464, %s22, 1
      %p466 = scmp.lt.s32.totalorder %s23, 0
      %s467 = scalar_select %p466, %s23, 0
      %s468 = sadd.s32 %s467, %s465
      %s469 = smul.addr %s468, 4
      %s470 = scalar_lea.vmem %s4, %s469
      %p471 = scmp.lt.s32.totalorder %s22, 1
      %s472 = scalar_select %p471, %s22, 1
      %p473 = scmp.lt.s32.totalorder %s23, 0
      %s474 = scalar_select %p473, %s23, 0
      %s475 = sadd.s32 %s474, %s472
      %s476 = smul.addr %s475, 4
      %s477 = scalar_lea.vmem %s5, %s476
      %p478 = scmp.lt.s32.totalorder %s22, 1
      %s479 = scalar_select %p478, %s22, 1
      %p480 = scmp.lt.s32.totalorder %s23, 0
      %s481 = scalar_select %p480, %s23, 0
      %s482 = sadd.s32 %s481, %s479
      %s483 = smul.addr %s482, 4
      %s484 = scalar_lea.vmem %s6, %s483
      // Predicated region
      $region37: #{tpu_custom_call.1} parent=35 // pred_check
        %p485 = pneg %p141
      $region38: #{tpu_custom_call.1} parent=35 // pred_check_branch
        %487 = sbr.rel (%p485) target = $region40
      $region39: #{tpu_custom_call.1} parent=35 // pred_region
        _
      $region40: #{tpu_custom_call.1} parent=35 // pred_fallthru
        _
      // Predicated region
      $region41: #{tpu_custom_call.1} parent=35 // pred_check
        %p488 = pneg %p169
      $region42: #{tpu_custom_call.1} parent=35 // pred_check_branch
        %490 = sbr.rel (%p488) target = $region44
      $region43: #{tpu_custom_call.1} parent=35 // pred_region
        _
      $region44: #{tpu_custom_call.1} parent=35 // pred_fallthru
        _
      // Predicated region
      $region45: #{tpu_custom_call.1} parent=35 // pred_check
        %p491 = pneg %p197
      $region46: #{tpu_custom_call.1} parent=35 // pred_check_branch
        %493 = sbr.rel (%p491) target = $region48
      $region47: #{tpu_custom_call.1} parent=35 // pred_region
        _
      $region48: #{tpu_custom_call.1} parent=35 // pred_fallthru
        _
    $region36: #{tpu_custom_call.1} parent=5 // pred_fallthru
      _
    %p494 = scmp.le.s32.totalorder 2, %s13
    // Predicated region
    $region49: #{tpu_custom_call.1} parent=5 // pred_check
      %p495 = pneg %p494
    $region50: #{tpu_custom_call.1} parent=5 // pred_check_branch
      %497 = sbr.rel (%p495) target = $region52
    $region51: #{tpu_custom_call.1} parent=5 // pred_region
      %s498 = ssub.s32 %s13, 2
      // Predicated region
      $region53: #{tpu_custom_call.1} parent=51 // pred_check
        %p499 = pneg %p147
      $region54: #{tpu_custom_call.1} parent=51 // pred_check_branch
        %501 = sbr.rel (%p499) target = $region56
      $region55: #{tpu_custom_call.1} parent=51 // pred_region
        %p502 = scmp.lt.s32.totalorder %s24, 1
        %s503 = scalar_select %p502, %s24, 1
        %p504 = scmp.lt.s32.totalorder %s25, 0
        %s505 = scalar_select %p504, %s25, 0
        %s506 = sadd.s32 %s505, %s503
        %s507 = smul.addr %s506, 4
        %s508 = scalar_lea.vmem %s4, %s507
      $region56: #{tpu_custom_call.1} parent=51 // pred_fallthru
        _
      // Predicated region
      $region57: #{tpu_custom_call.1} parent=51 // pred_check
        %p509 = pneg %p175
      $region58: #{tpu_custom_call.1} parent=51 // pred_check_branch
        %511 = sbr.rel (%p509) target = $region60
      $region59: #{tpu_custom_call.1} parent=51 // pred_region
        %p512 = scmp.lt.s32.totalorder %s24, 1
        %s513 = scalar_select %p512, %s24, 1
        %p514 = scmp.lt.s32.totalorder %s25, 0
        %s515 = scalar_select %p514, %s25, 0
        %s516 = sadd.s32 %s515, %s513
        %s517 = smul.addr %s516, 4
        %s518 = scalar_lea.vmem %s5, %s517
      $region60: #{tpu_custom_call.1} parent=51 // pred_fallthru
        _
      // Predicated region
      $region61: #{tpu_custom_call.1} parent=51 // pred_check
        %p519 = pneg %p203
      $region62: #{tpu_custom_call.1} parent=51 // pred_check_branch
        %521 = sbr.rel (%p519) target = $region64
      $region63: #{tpu_custom_call.1} parent=51 // pred_region
        %p522 = scmp.lt.s32.totalorder %s24, 1
        %s523 = scalar_select %p522, %s24, 1
        %p524 = scmp.lt.s32.totalorder %s25, 0
        %s525 = scalar_select %p524, %s25, 0
        %s526 = sadd.s32 %s525, %s523
        %s527 = smul.addr %s526, 4
        %s528 = scalar_lea.vmem %s6, %s527
      $region64: #{tpu_custom_call.1} parent=51 // pred_fallthru
        _
    $region52: #{tpu_custom_call.1} parent=5 // pred_fallthru
      _
  $region6: #{tpu_custom_call.1} parent=0 // loop_footer
    %s17 = sadd.s32 1, %s13
  $region7: #{tpu_custom_call.1} parent=0 // loop_footer_branch
    %12 = sbr.rel target = $region3
  $region8: #{tpu_custom_call.1} parent=0 // loop_exit
    _

</llo_original>
